<compile_context>
chip_gen: v6e
topology: v6e:2x2x1
jax: 0.10.0
libtpu: 0.0.40
codegen_flags: <defaults>
</compile_context>

<pallas_src>
import functools

import jax
import jax.numpy as jnp
from jax import lax
from jax.experimental import pallas as pl
from jax.experimental.pallas import tpu as pltpu

EPS = 1e-5  # PyTorch InstanceNorm2d default eps


def _make_kernel(H, W):
    HW = H * W

    def kernel(x_ref, w1_ref, b1_ref, w2_ref, b2_ref, o_ref):
        nb, C = x_ref.shape[0], x_ref.shape[1]

        # Lane-only border masks, shape (1, HW): broadcast for free inside the selects.
        p = lax.broadcasted_iota(jnp.int32, (1, HW), 1)
        colm = p % W                       # one tiny (1, HW) mod; no (C, HW) int arrays
        w_first = colm == 0
        w_last = colm == (W - 1)
        h_first = p < W
        h_last = p >= (HW - W)

        def shift(a, s):
            # result[q] = a[(q + s) % HW]  -- cyclic lane rotation on the XLU.
            return pltpu.roll(a, (-s) % HW, axis=1)

        def conv3x3_reflect(a, w_ref, b_ref):
            # a: (C, HW) f32 activations.
            # w_ref[kx]: (Cout, 3*Cin) bf16, ky-stacked taps. b_ref: (C, 1) f32.
            r_wp = shift(a, 1)    # a[h, w+1] (cyclic)
            r_wm = shift(a, -1)   # a[h, w-1] (cyclic)
            ax = (jnp.where(w_first, r_wp, r_wm),   # dx=-1: a[h, reflect(w-1)]
                  a,                                 # dx= 0
                  jnp.where(w_last, r_wm, r_wp))     # dx=+1: a[h, reflect(w+1)]
            acc = None
            for kx in range(3):
                axv = ax[kx]
                r_hp = shift(axv, W)    # ax[h+1, w] (cyclic)
                r_hm = shift(axv, -W)   # ax[h-1, w] (cyclic)
                # Stack the 3 ky-shifted slabs along the contraction dim -> (3C, HW),
                # cast to bf16 only for the MXU operand.
                ay_stack = jnp.concatenate(
                    [jnp.where(h_first, r_hp, r_hm),   # dy=-1: ax[reflect(h-1), w]
                     axv,                               # dy= 0
                     jnp.where(h_last, r_hm, r_hp)],    # dy=+1: ax[reflect(h+1), w]
                    axis=0).astype(jnp.bfloat16)
                d = jnp.dot(w_ref[kx], ay_stack,
                            preferred_element_type=jnp.float32)
                acc = d if acc is None else acc + d     # straight f32 chain (MRB on v7x)
            return acc + b_ref[...]

        def instance_norm(a):
            # Per-channel spatial normalization, biased variance, no affine.
            m = jnp.mean(a, axis=-1, keepdims=True)
            d = a - m
            v = jnp.mean(d * d, axis=-1, keepdims=True)
            return d * lax.rsqrt(v + EPS)

        for i in range(nb):
            x = x_ref[i].astype(jnp.float32)                   # (C, HW), lane-dense
            y = conv3x3_reflect(x, w1_ref, b1_ref)
            y = jnp.maximum(instance_norm(y), 0.0)             # InstanceNorm + ReLU
            y = conv3x3_reflect(y, w2_ref, b2_ref)
            y = instance_norm(y)                               # InstanceNorm
            # Residual add; re-read x to keep live ranges short, one full-width store.
            o_ref[i] = (x_ref[i].astype(jnp.float32) + y).astype(o_ref.dtype)

    return kernel


@functools.partial(jax.jit, static_argnames=("nb",))
def resnet_block(x, w1, b1, w2, b2, nb=1):
    N, C, H, W = x.shape
    if N % nb:
        raise ValueError("nb must divide the batch size")
    HW = H * W
    x2 = x.reshape(N, C, HW)                                   # free for contiguous NCHW
    # K-stacked bf16 taps: w_taps[kx, cout, ky*C + cin] = w[cout, cin, ky, kx]
    w1_taps = jnp.transpose(w1, (3, 0, 2, 1)).reshape(3, C, 3 * C).astype(jnp.bfloat16)
    w2_taps = jnp.transpose(w2, (3, 0, 2, 1)).reshape(3, C, 3 * C).astype(jnp.bfloat16)
    b1_col = b1.reshape(C, 1).astype(jnp.float32)
    b2_col = b2.reshape(C, 1).astype(jnp.float32)

    out = pl.pallas_call(
        _make_kernel(H, W),
        out_shape=jax.ShapeDtypeStruct((N, C, HW), x.dtype),
        grid=(N // nb,),
        in_specs=[
            pl.BlockSpec((nb, C, HW), lambda n: (n, 0, 0)),      # batch block
            pl.BlockSpec((3, C, 3 * C), lambda n: (0, 0, 0)),    # w1 taps, VMEM-resident
            pl.BlockSpec((C, 1), lambda n: (0, 0)),              # b1
            pl.BlockSpec((3, C, 3 * C), lambda n: (0, 0, 0)),    # w2 taps, VMEM-resident
            pl.BlockSpec((C, 1), lambda n: (0, 0)),              # b2
        ],
        out_specs=pl.BlockSpec((nb, C, HW), lambda n: (n, 0, 0)),
        compiler_params=pltpu.CompilerParams(
            dimension_semantics=("parallel",),
            vmem_limit_bytes=32 * 1024 * 1024,   # explicit budget; fits v7x 64 MiB VMEM
        ),
    )(x2, w1_taps, b1_col, w2_taps, b2_col)
    return out.reshape(N, C, H, W)


def _ref_forward(x, w1, b1, w2, b2, conv_dtype=jnp.float32):
    # Pure-JAX reference matching the PyTorch module. conv_dtype=bfloat16 mirrors the
    # kernel's MXU operand precision (f32 accumulation in both).
    def conv(z, w, b):
        y = lax.conv_general_dilated(
            z.astype(conv_dtype), w.astype(conv_dtype),
            window_strides=(1, 1), padding="VALID",
            dimension_numbers=("NCHW", "OIHW", "NCHW"),
            preferred_element_type=jnp.float32, precision="highest")
        return y + b[None, :, None, None].astype(jnp.float32)

    def inorm(z):
        m = z.mean(axis=(2, 3), keepdims=True)
        v = ((z - m) ** 2).mean(axis=(2, 3), keepdims=True)
        return (z - m) / jnp.sqrt(v + EPS)

    x32 = x.astype(jnp.float32)
    pd = jnp.pad(x32, ((0, 0), (0, 0), (1, 1), (1, 1)), mode="reflect")
    y = jnp.maximum(inorm(conv(pd, w1, b1)), 0.0)
    pd = jnp.pad(y, ((0, 0), (0, 0), (1, 1), (1, 1)), mode="reflect")
    y = inorm(conv(pd, w2, b2))
    return x32 + y


if __name__ == "__main__":
    N, C, H, W = 2, 4, 16, 16
    key = jax.random.PRNGKey(0)
    k1, k2, k3, k4, k5 = jax.random.split(key, 5)

    x = jax.random.normal(k1, (N, C, H, W), dtype=jnp.float32)
    w1 = jax.random.normal(k2, (C, C, 3, 3), dtype=jnp.float32) * 0.1
    b1 = jax.random.normal(k3, (C,), dtype=jnp.float32) * 0.1
    w2 = jax.random.normal(k4, (C, C, 3, 3), dtype=jnp.float32) * 0.1
    b2 = jax.random.normal(k5, (C,), dtype=jnp.float32) * 0.1

    out = jax.block_until_ready(resnet_block(x, w1, b1, w2, b2))

    # Tight check vs a reference with matching (bf16-operand, f32-accumulate) precision,
    # plus a looser sanity check vs the full-f32 reference of the PyTorch module.
    ref_bf16 = _ref_forward(x, w1, b1, w2, b2, conv_dtype=jnp.bfloat16)
    ref_f32 = _ref_forward(x, w1, b1, w2, b2, conv_dtype=jnp.float32)
    ok = bool(jnp.allclose(out, ref_bf16, atol=1e-2, rtol=1e-2))
    ok = ok and bool(jnp.allclose(out, ref_f32, atol=5e-2, rtol=5e-2))
    if not ok:
        raise SystemExit("Pallas kernel output mismatches JAX reference")
    print("KERNEL_OK")
</pallas_src>

<mosaic_0001>
module attributes {stable_mosaic.version = 11 : i64} {
  func.func @kernel(%arg0: i32, %arg1: memref<1x4x256xf32, #tpu.memory_space<vmem>>, %arg2: memref<3x4x12xbf16, #tpu.memory_space<vmem>>, %arg3: memref<4x1xf32, #tpu.memory_space<vmem>>, %arg4: memref<3x4x12xbf16, #tpu.memory_space<vmem>>, %arg5: memref<4x1xf32, #tpu.memory_space<vmem>>, %arg6: memref<1x4x256xf32, #tpu.memory_space<vmem>>) attributes {dimension_semantics = [#tpu.dimension_semantics<parallel>], iteration_bounds = array<i64: 2>, scalar_prefetch = 0 : i64, scratch_operands = 0 : i64, tpu.core_type = #tpu.core_type<tc>, window_params = [{transform_indices = @transform_0, window_bounds = array<i64: 1, 4, 256>}, {pipeline_mode = #tpu.pipeline_mode<synchronous>, transform_indices = @transform_1, window_bounds = array<i64: 3, 4, 12>}, {pipeline_mode = #tpu.pipeline_mode<synchronous>, transform_indices = @transform_2, window_bounds = array<i64: 4, 1>}, {pipeline_mode = #tpu.pipeline_mode<synchronous>, transform_indices = @transform_3, window_bounds = array<i64: 3, 4, 12>}, {pipeline_mode = #tpu.pipeline_mode<synchronous>, transform_indices = @transform_4, window_bounds = array<i64: 4, 1>}, {transform_indices = @transform_5, window_bounds = array<i64: 1, 4, 256>}]} {
    %0 = tpu.iota {dimensions = array<i32: 1>} : vector<1x256xi32>
    %c16_i32 = arith.constant 16 : i32
    %c0_i32 = arith.constant 0 : i32
    %1 = arith.cmpi eq, %c16_i32, %c0_i32 : i32
    %c1_i32 = arith.constant 1 : i32
    %2 = arith.select %1, %c1_i32, %c16_i32 : i32
    %3 = vector.broadcast %2 : i32 to vector<1x256xi32>
    %4 = arith.remsi %0, %3 : vector<1x256xi32>
    %c0_i32_0 = arith.constant 0 : i32
    %5 = vector.broadcast %c0_i32_0 : i32 to vector<1x256xi32>
    %6 = arith.cmpi ne, %4, %5 : vector<1x256xi32>
    %c0_i32_1 = arith.constant 0 : i32
    %7 = vector.broadcast %c0_i32_1 : i32 to vector<1x256xi32>
    %8 = arith.cmpi slt, %4, %7 : vector<1x256xi32>
    %c0_i32_2 = arith.constant 0 : i32
    %9 = arith.cmpi slt, %2, %c0_i32_2 : i32
    %10 = vector.broadcast %9 : i1 to vector<1x256xi1>
    %11 = vector.broadcast %10 : vector<1x256xi1> to vector<1x256xi1>
    %12 = arith.xori %8, %11 : vector<1x256xi1>
    %13 = arith.andi %12, %6 : vector<1x256xi1>
    %14 = vector.broadcast %2 : i32 to vector<1x256xi32>
    %15 = arith.addi %4, %14 : vector<1x256xi32>
    %16 = arith.select %13, %15, %4 : vector<1x256xi1>, vector<1x256xi32>
    %c0_i32_3 = arith.constant 0 : i32
    %17 = vector.broadcast %c0_i32_3 : i32 to vector<1x256xi32>
    %18 = arith.cmpi eq, %16, %17 : vector<1x256xi32>
    %c15_i32 = arith.constant 15 : i32
    %19 = vector.broadcast %c15_i32 : i32 to vector<1x256xi32>
    %20 = arith.cmpi eq, %16, %19 : vector<1x256xi32>
    %c16_i32_4 = arith.constant 16 : i32
    %21 = vector.broadcast %c16_i32_4 : i32 to vector<1x256xi32>
    %22 = arith.cmpi slt, %0, %21 : vector<1x256xi32>
    %c240_i32 = arith.constant 240 : i32
    %23 = vector.broadcast %c240_i32 : i32 to vector<1x256xi32>
    %24 = arith.cmpi sge, %0, %23 : vector<1x256xi32>
    %c0 = arith.constant 0 : index
    %c0_5 = arith.constant 0 : index
    %c0_6 = arith.constant 0 : index
    %25 = vector.load %arg1[%c0, %c0_5, %c0_6] : memref<1x4x256xf32, #tpu.memory_space<vmem>>, vector<1x4x256xf32>
    %26 = vector.shape_cast %25 : vector<1x4x256xf32> to vector<4x256xf32>
    %c255_i32 = arith.constant 255 : i32
    %27 = tpu.dynamic_rotate %26 by %c255_i32 dim 1 : vector<4x256xf32>, i32 -> vector<4x256xf32>
    %c1_i32_7 = arith.constant 1 : i32
    %28 = tpu.dynamic_rotate %26 by %c1_i32_7 dim 1 : vector<4x256xf32>, i32 -> vector<4x256xf32>
    %29 = vector.shape_cast %18 : vector<1x256xi1> to vector<1x256xi1>
    %30 = vector.broadcast %29 : vector<1x256xi1> to vector<4x256xi1>
    %31 = arith.select %30, %27, %28 : vector<4x256xi1>, vector<4x256xf32>
    %32 = vector.shape_cast %20 : vector<1x256xi1> to vector<1x256xi1>
    %33 = vector.broadcast %32 : vector<1x256xi1> to vector<4x256xi1>
    %34 = arith.select %33, %28, %27 : vector<4x256xi1>, vector<4x256xf32>
    %c240_i32_8 = arith.constant 240 : i32
    %35 = tpu.dynamic_rotate %31 by %c240_i32_8 dim 1 : vector<4x256xf32>, i32 -> vector<4x256xf32>
    %c16_i32_9 = arith.constant 16 : i32
    %36 = tpu.dynamic_rotate %31 by %c16_i32_9 dim 1 : vector<4x256xf32>, i32 -> vector<4x256xf32>
    %37 = vector.shape_cast %22 : vector<1x256xi1> to vector<1x256xi1>
    %38 = vector.broadcast %37 : vector<1x256xi1> to vector<4x256xi1>
    %39 = arith.select %38, %35, %36 : vector<4x256xi1>, vector<4x256xf32>
    %40 = vector.shape_cast %24 : vector<1x256xi1> to vector<1x256xi1>
    %41 = vector.broadcast %40 : vector<1x256xi1> to vector<4x256xi1>
    %42 = arith.select %41, %36, %35 : vector<4x256xi1>, vector<4x256xf32>
    %43 = tpu.concatenate %39, %31, %42 in 0 : vector<4x256xf32>, vector<4x256xf32>, vector<4x256xf32> -> vector<12x256xf32>
    %44 = arith.truncf %43 : vector<12x256xf32> to vector<12x256xbf16>
    %c0_10 = arith.constant 0 : index
    %c0_11 = arith.constant 0 : index
    %c0_12 = arith.constant 0 : index
    %45 = vector.load %arg2[%c0_10, %c0_11, %c0_12] : memref<3x4x12xbf16, #tpu.memory_space<vmem>>, vector<1x4x12xbf16>
    %46 = vector.shape_cast %45 : vector<1x4x12xbf16> to vector<4x12xbf16>
    %cst = arith.constant dense<0.000000e+00> : vector<4x256xf32>
    %47 = tpu.matmul %46, %44, %cst {dimension_numbers = #tpu.dot_dimension_numbers<[1], [0], [0], [1], [0, 0, 1, 1], [], []>} : vector<4x12xbf16>, vector<12x256xbf16>, vector<4x256xf32> -> vector<4x256xf32>
    %c240_i32_13 = arith.constant 240 : i32
    %48 = tpu.dynamic_rotate %26 by %c240_i32_13 dim 1 : vector<4x256xf32>, i32 -> vector<4x256xf32>
    %c16_i32_14 = arith.constant 16 : i32
    %49 = tpu.dynamic_rotate %26 by %c16_i32_14 dim 1 : vector<4x256xf32>, i32 -> vector<4x256xf32>
    %50 = vector.shape_cast %22 : vector<1x256xi1> to vector<1x256xi1>
    %51 = vector.broadcast %50 : vector<1x256xi1> to vector<4x256xi1>
    %52 = arith.select %51, %48, %49 : vector<4x256xi1>, vector<4x256xf32>
    %53 = vector.shape_cast %24 : vector<1x256xi1> to vector<1x256xi1>
    %54 = vector.broadcast %53 : vector<1x256xi1> to vector<4x256xi1>
    %55 = arith.select %54, %49, %48 : vector<4x256xi1>, vector<4x256xf32>
    %56 = tpu.concatenate %52, %26, %55 in 0 : vector<4x256xf32>, vector<4x256xf32>, vector<4x256xf32> -> vector<12x256xf32>
    %57 = arith.truncf %56 : vector<12x256xf32> to vector<12x256xbf16>
    %c1 = arith.constant 1 : index
    %c0_15 = arith.constant 0 : index
    %c0_16 = arith.constant 0 : index
    %58 = vector.load %arg2[%c1, %c0_15, %c0_16] : memref<3x4x12xbf16, #tpu.memory_space<vmem>>, vector<1x4x12xbf16>
    %59 = vector.shape_cast %58 : vector<1x4x12xbf16> to vector<4x12xbf16>
    %cst_17 = arith.constant dense<0.000000e+00> : vector<4x256xf32>
    %60 = tpu.matmul %59, %57, %cst_17 {dimension_numbers = #tpu.dot_dimension_numbers<[1], [0], [0], [1], [0, 0, 1, 1], [], []>} : vector<4x12xbf16>, vector<12x256xbf16>, vector<4x256xf32> -> vector<4x256xf32>
    %61 = arith.addf %47, %60 : vector<4x256xf32>
    %c240_i32_18 = arith.constant 240 : i32
    %62 = tpu.dynamic_rotate %34 by %c240_i32_18 dim 1 : vector<4x256xf32>, i32 -> vector<4x256xf32>
    %c16_i32_19 = arith.constant 16 : i32
    %63 = tpu.dynamic_rotate %34 by %c16_i32_19 dim 1 : vector<4x256xf32>, i32 -> vector<4x256xf32>
    %64 = vector.shape_cast %22 : vector<1x256xi1> to vector<1x256xi1>
    %65 = vector.broadcast %64 : vector<1x256xi1> to vector<4x256xi1>
    %66 = arith.select %65, %62, %63 : vector<4x256xi1>, vector<4x256xf32>
    %67 = vector.shape_cast %24 : vector<1x256xi1> to vector<1x256xi1>
    %68 = vector.broadcast %67 : vector<1x256xi1> to vector<4x256xi1>
    %69 = arith.select %68, %63, %62 : vector<4x256xi1>, vector<4x256xf32>
    %70 = tpu.concatenate %66, %34, %69 in 0 : vector<4x256xf32>, vector<4x256xf32>, vector<4x256xf32> -> vector<12x256xf32>
    %71 = arith.truncf %70 : vector<12x256xf32> to vector<12x256xbf16>
    %c2 = arith.constant 2 : index
    %c0_20 = arith.constant 0 : index
    %c0_21 = arith.constant 0 : index
    %72 = vector.load %arg2[%c2, %c0_20, %c0_21] : memref<3x4x12xbf16, #tpu.memory_space<vmem>>, vector<1x4x12xbf16>
    %73 = vector.shape_cast %72 : vector<1x4x12xbf16> to vector<4x12xbf16>
    %cst_22 = arith.constant dense<0.000000e+00> : vector<4x256xf32>
    %74 = tpu.matmul %73, %71, %cst_22 {dimension_numbers = #tpu.dot_dimension_numbers<[1], [0], [0], [1], [0, 0, 1, 1], [], []>} : vector<4x12xbf16>, vector<12x256xbf16>, vector<4x256xf32> -> vector<4x256xf32>
    %75 = arith.addf %61, %74 : vector<4x256xf32>
    %c0_23 = arith.constant 0 : index
    %c0_24 = arith.constant 0 : index
    %76 = vector.load %arg3[%c0_23, %c0_24] : memref<4x1xf32, #tpu.memory_space<vmem>>, vector<4x1xf32>
    %77 = vector.broadcast %76 : vector<4x1xf32> to vector<4x256xf32>
    %78 = arith.addf %75, %77 : vector<4x256xf32>
    %cst_25 = arith.constant dense<0.000000e+00> : vector<4xf32>
    %79 = vector.multi_reduction <add>, %78, %cst_25 [1] : vector<4x256xf32> to vector<4xf32>
    %80 = vector.shape_cast %79 : vector<4xf32> to vector<4x1xf32>
    %cst_26 = arith.constant 2.560000e+02 : f32
    %81 = vector.broadcast %cst_26 : f32 to vector<4x1xf32>
    %82 = arith.divf %80, %81 : vector<4x1xf32>
    %83 = vector.broadcast %82 : vector<4x1xf32> to vector<4x256xf32>
    %84 = arith.subf %78, %83 : vector<4x256xf32>
    %85 = arith.mulf %84, %84 : vector<4x256xf32>
    %cst_27 = arith.constant dense<0.000000e+00> : vector<4xf32>
    %86 = vector.multi_reduction <add>, %85, %cst_27 [1] : vector<4x256xf32> to vector<4xf32>
    %87 = vector.shape_cast %86 : vector<4xf32> to vector<4x1xf32>
    %cst_28 = arith.constant 2.560000e+02 : f32
    %88 = vector.broadcast %cst_28 : f32 to vector<4x1xf32>
    %89 = arith.divf %87, %88 : vector<4x1xf32>
    %cst_29 = arith.constant 9.99999974E-6 : f32
    %90 = vector.broadcast %cst_29 : f32 to vector<4x1xf32>
    %91 = arith.addf %89, %90 : vector<4x1xf32>
    %92 = math.rsqrt %91 : vector<4x1xf32>
    %93 = vector.broadcast %92 : vector<4x1xf32> to vector<4x256xf32>
    %94 = arith.mulf %84, %93 : vector<4x256xf32>
    %cst_30 = arith.constant 0.000000e+00 : f32
    %95 = vector.broadcast %cst_30 : f32 to vector<4x256xf32>
    %96 = arith.maximumf %94, %95 : vector<4x256xf32>
    %c255_i32_31 = arith.constant 255 : i32
    %97 = tpu.dynamic_rotate %96 by %c255_i32_31 dim 1 : vector<4x256xf32>, i32 -> vector<4x256xf32>
    %c1_i32_32 = arith.constant 1 : i32
    %98 = tpu.dynamic_rotate %96 by %c1_i32_32 dim 1 : vector<4x256xf32>, i32 -> vector<4x256xf32>
    %99 = vector.shape_cast %18 : vector<1x256xi1> to vector<1x256xi1>
    %100 = vector.broadcast %99 : vector<1x256xi1> to vector<4x256xi1>
    %101 = arith.select %100, %97, %98 : vector<4x256xi1>, vector<4x256xf32>
    %102 = vector.shape_cast %20 : vector<1x256xi1> to vector<1x256xi1>
    %103 = vector.broadcast %102 : vector<1x256xi1> to vector<4x256xi1>
    %104 = arith.select %103, %98, %97 : vector<4x256xi1>, vector<4x256xf32>
    %c240_i32_33 = arith.constant 240 : i32
    %105 = tpu.dynamic_rotate %101 by %c240_i32_33 dim 1 : vector<4x256xf32>, i32 -> vector<4x256xf32>
    %c16_i32_34 = arith.constant 16 : i32
    %106 = tpu.dynamic_rotate %101 by %c16_i32_34 dim 1 : vector<4x256xf32>, i32 -> vector<4x256xf32>
    %107 = vector.shape_cast %22 : vector<1x256xi1> to vector<1x256xi1>
    %108 = vector.broadcast %107 : vector<1x256xi1> to vector<4x256xi1>
    %109 = arith.select %108, %105, %106 : vector<4x256xi1>, vector<4x256xf32>
    %110 = vector.shape_cast %24 : vector<1x256xi1> to vector<1x256xi1>
    %111 = vector.broadcast %110 : vector<1x256xi1> to vector<4x256xi1>
    %112 = arith.select %111, %106, %105 : vector<4x256xi1>, vector<4x256xf32>
    %113 = tpu.concatenate %109, %101, %112 in 0 : vector<4x256xf32>, vector<4x256xf32>, vector<4x256xf32> -> vector<12x256xf32>
    %114 = arith.truncf %113 : vector<12x256xf32> to vector<12x256xbf16>
    %c0_35 = arith.constant 0 : index
    %c0_36 = arith.constant 0 : index
    %c0_37 = arith.constant 0 : index
    %115 = vector.load %arg4[%c0_35, %c0_36, %c0_37] : memref<3x4x12xbf16, #tpu.memory_space<vmem>>, vector<1x4x12xbf16>
    %116 = vector.shape_cast %115 : vector<1x4x12xbf16> to vector<4x12xbf16>
    %cst_38 = arith.constant dense<0.000000e+00> : vector<4x256xf32>
    %117 = tpu.matmul %116, %114, %cst_38 {dimension_numbers = #tpu.dot_dimension_numbers<[1], [0], [0], [1], [0, 0, 1, 1], [], []>} : vector<4x12xbf16>, vector<12x256xbf16>, vector<4x256xf32> -> vector<4x256xf32>
    %c240_i32_39 = arith.constant 240 : i32
    %118 = tpu.dynamic_rotate %96 by %c240_i32_39 dim 1 : vector<4x256xf32>, i32 -> vector<4x256xf32>
    %c16_i32_40 = arith.constant 16 : i32
    %119 = tpu.dynamic_rotate %96 by %c16_i32_40 dim 1 : vector<4x256xf32>, i32 -> vector<4x256xf32>
    %120 = vector.shape_cast %22 : vector<1x256xi1> to vector<1x256xi1>
    %121 = vector.broadcast %120 : vector<1x256xi1> to vector<4x256xi1>
    %122 = arith.select %121, %118, %119 : vector<4x256xi1>, vector<4x256xf32>
    %123 = vector.shape_cast %24 : vector<1x256xi1> to vector<1x256xi1>
    %124 = vector.broadcast %123 : vector<1x256xi1> to vector<4x256xi1>
    %125 = arith.select %124, %119, %118 : vector<4x256xi1>, vector<4x256xf32>
    %126 = tpu.concatenate %122, %96, %125 in 0 : vector<4x256xf32>, vector<4x256xf32>, vector<4x256xf32> -> vector<12x256xf32>
    %127 = arith.truncf %126 : vector<12x256xf32> to vector<12x256xbf16>
    %c1_41 = arith.constant 1 : index
    %c0_42 = arith.constant 0 : index
    %c0_43 = arith.constant 0 : index
    %128 = vector.load %arg4[%c1_41, %c0_42, %c0_43] : memref<3x4x12xbf16, #tpu.memory_space<vmem>>, vector<1x4x12xbf16>
    %129 = vector.shape_cast %128 : vector<1x4x12xbf16> to vector<4x12xbf16>
    %cst_44 = arith.constant dense<0.000000e+00> : vector<4x256xf32>
    %130 = tpu.matmul %129, %127, %cst_44 {dimension_numbers = #tpu.dot_dimension_numbers<[1], [0], [0], [1], [0, 0, 1, 1], [], []>} : vector<4x12xbf16>, vector<12x256xbf16>, vector<4x256xf32> -> vector<4x256xf32>
    %131 = arith.addf %117, %130 : vector<4x256xf32>
    %c240_i32_45 = arith.constant 240 : i32
    %132 = tpu.dynamic_rotate %104 by %c240_i32_45 dim 1 : vector<4x256xf32>, i32 -> vector<4x256xf32>
    %c16_i32_46 = arith.constant 16 : i32
    %133 = tpu.dynamic_rotate %104 by %c16_i32_46 dim 1 : vector<4x256xf32>, i32 -> vector<4x256xf32>
    %134 = vector.shape_cast %22 : vector<1x256xi1> to vector<1x256xi1>
    %135 = vector.broadcast %134 : vector<1x256xi1> to vector<4x256xi1>
    %136 = arith.select %135, %132, %133 : vector<4x256xi1>, vector<4x256xf32>
    %137 = vector.shape_cast %24 : vector<1x256xi1> to vector<1x256xi1>
    %138 = vector.broadcast %137 : vector<1x256xi1> to vector<4x256xi1>
    %139 = arith.select %138, %133, %132 : vector<4x256xi1>, vector<4x256xf32>
    %140 = tpu.concatenate %136, %104, %139 in 0 : vector<4x256xf32>, vector<4x256xf32>, vector<4x256xf32> -> vector<12x256xf32>
    %141 = arith.truncf %140 : vector<12x256xf32> to vector<12x256xbf16>
    %c2_47 = arith.constant 2 : index
    %c0_48 = arith.constant 0 : index
    %c0_49 = arith.constant 0 : index
    %142 = vector.load %arg4[%c2_47, %c0_48, %c0_49] : memref<3x4x12xbf16, #tpu.memory_space<vmem>>, vector<1x4x12xbf16>
    %143 = vector.shape_cast %142 : vector<1x4x12xbf16> to vector<4x12xbf16>
    %cst_50 = arith.constant dense<0.000000e+00> : vector<4x256xf32>
    %144 = tpu.matmul %143, %141, %cst_50 {dimension_numbers = #tpu.dot_dimension_numbers<[1], [0], [0], [1], [0, 0, 1, 1], [], []>} : vector<4x12xbf16>, vector<12x256xbf16>, vector<4x256xf32> -> vector<4x256xf32>
    %145 = arith.addf %131, %144 : vector<4x256xf32>
    %c0_51 = arith.constant 0 : index
    %c0_52 = arith.constant 0 : index
    %146 = vector.load %arg5[%c0_51, %c0_52] : memref<4x1xf32, #tpu.memory_space<vmem>>, vector<4x1xf32>
    %147 = vector.broadcast %146 : vector<4x1xf32> to vector<4x256xf32>
    %148 = arith.addf %145, %147 : vector<4x256xf32>
    %cst_53 = arith.constant dense<0.000000e+00> : vector<4xf32>
    %149 = vector.multi_reduction <add>, %148, %cst_53 [1] : vector<4x256xf32> to vector<4xf32>
    %150 = vector.shape_cast %149 : vector<4xf32> to vector<4x1xf32>
    %cst_54 = arith.constant 2.560000e+02 : f32
    %151 = vector.broadcast %cst_54 : f32 to vector<4x1xf32>
    %152 = arith.divf %150, %151 : vector<4x1xf32>
    %153 = vector.broadcast %152 : vector<4x1xf32> to vector<4x256xf32>
    %154 = arith.subf %148, %153 : vector<4x256xf32>
    %155 = arith.mulf %154, %154 : vector<4x256xf32>
    %cst_55 = arith.constant dense<0.000000e+00> : vector<4xf32>
    %156 = vector.multi_reduction <add>, %155, %cst_55 [1] : vector<4x256xf32> to vector<4xf32>
    %157 = vector.shape_cast %156 : vector<4xf32> to vector<4x1xf32>
    %cst_56 = arith.constant 2.560000e+02 : f32
    %158 = vector.broadcast %cst_56 : f32 to vector<4x1xf32>
    %159 = arith.divf %157, %158 : vector<4x1xf32>
    %cst_57 = arith.constant 9.99999974E-6 : f32
    %160 = vector.broadcast %cst_57 : f32 to vector<4x1xf32>
    %161 = arith.addf %159, %160 : vector<4x1xf32>
    %162 = math.rsqrt %161 : vector<4x1xf32>
    %163 = vector.broadcast %162 : vector<4x1xf32> to vector<4x256xf32>
    %164 = arith.mulf %154, %163 : vector<4x256xf32>
    %c0_58 = arith.constant 0 : index
    %c0_59 = arith.constant 0 : index
    %c0_60 = arith.constant 0 : index
    %165 = vector.load %arg1[%c0_58, %c0_59, %c0_60] : memref<1x4x256xf32, #tpu.memory_space<vmem>>, vector<1x4x256xf32>
    %166 = vector.shape_cast %165 : vector<1x4x256xf32> to vector<4x256xf32>
    %167 = arith.addf %166, %164 : vector<4x256xf32>
    %c0_61 = arith.constant 0 : index
    %c0_62 = arith.constant 0 : index
    %c0_63 = arith.constant 0 : index
    %168 = vector.load %arg6[%c0_61, %c0_62, %c0_63] : memref<1x4x256xf32, #tpu.memory_space<vmem>>, vector<1x4x256xf32>
    %169 = vector.shape_cast %168 : vector<1x4x256xf32> to vector<4x256xf32>
    %170 = vector.shape_cast %167 : vector<4x256xf32> to vector<1x4x256xf32>
    tpu.vector_store %arg6[%c0_61, %c0_62, %c0_63], %170 {strides = array<i32>} : memref<1x4x256xf32, #tpu.memory_space<vmem>>, vector<1x4x256xf32>,
    return
  }
  func.func @transform_0(%arg0: i32) -> (i32, i32, i32) {
    %c0_i32 = arith.constant 0 : i32
    %c0_i32_0 = arith.constant 0 : i32
    %c0_i32_1 = arith.constant 0 : i32
    return %arg0, %c0_i32, %c0_i32_0 : i32, i32, i32
  }
  func.func @transform_1(%arg0: i32) -> (i32, i32, i32) {
    %c0_i32 = arith.constant 0 : i32
    %c0_i32_0 = arith.constant 0 : i32
    %c0_i32_1 = arith.constant 0 : i32
    %c0_i32_2 = arith.constant 0 : i32
    return %c0_i32, %c0_i32_0, %c0_i32_1 : i32, i32, i32
  }
  func.func @transform_2(%arg0: i32) -> (i32, i32) {
    %c0_i32 = arith.constant 0 : i32
    %c0_i32_0 = arith.constant 0 : i32
    %c0_i32_1 = arith.constant 0 : i32
    return %c0_i32, %c0_i32_0 : i32, i32
  }
  func.func @transform_3(%arg0: i32) -> (i32, i32, i32) {
    %c0_i32 = arith.constant 0 : i32
    %c0_i32_0 = arith.constant 0 : i32
    %c0_i32_1 = arith.constant 0 : i32
    %c0_i32_2 = arith.constant 0 : i32
    return %c0_i32, %c0_i32_0, %c0_i32_1 : i32, i32, i32
  }
  func.func @transform_4(%arg0: i32) -> (i32, i32) {
    %c0_i32 = arith.constant 0 : i32
    %c0_i32_0 = arith.constant 0 : i32
    %c0_i32_1 = arith.constant 0 : i32
    return %c0_i32, %c0_i32_0 : i32, i32
  }
  func.func @transform_5(%arg0: i32) -> (i32, i32, i32) {
    %c0_i32 = arith.constant 0 : i32
    %c0_i32_0 = arith.constant 0 : i32
    %c0_i32_1 = arith.constant 0 : i32
    return %arg0, %c0_i32, %c0_i32_0 : i32, i32, i32
  }
}

</mosaic_0001>

<llo_original>
// kernel: resnet_block.1
$region0: #{resnet_block.1}
  #allocation0 [shape = 'u32[]', space=smem, size = 0x4, offset = 0x4, fixed_abs, tag = 'smem constant byte address 0x4 - core index']
  #allocation1 [shape = 'u32[144,128]{1,0:T(1,128)}', space=vmem, size = 0x12000, scoped, tag = 'internal scratch']
  %s0 = inlined_call_operand.vmem [shape: f32[2,4,256], index: 0, kind: input, shape index: {}]
  %s1 = inlined_call_operand.vmem [shape: bf16[3,4,12], index: 1, kind: input, shape index: {}]
  %s2 = inlined_call_operand.vmem [shape: f32[4,1], index: 2, kind: input, shape index: {}]
  %s3 = inlined_call_operand.vmem [shape: bf16[3,4,12], index: 3, kind: input, shape index: {}]
  %s4 = inlined_call_operand.vmem [shape: f32[4,1], index: 4, kind: input, shape index: {}]
  %s5 = inlined_call_operand.vmem [shape: f32[2,4,256], index: 5, kind: output, shape index: {}]
  %s6 = sld [smem:[#allocation0]]
  $region53: #{resnet_block.1} parent=0
    _
  %s8 = ssub.s32 1, %s6
  %s9 = scalar_select 0, %s8, %s6
  loop: start=0, step=1, limit=4
  $region2: #{resnet_block.1} parent=0 // loop_pre_header
    _
  $region3: #{resnet_block.1} parent=0 // loop_header
    %s11 = sphi 0, %s15
    %p12 = scmp.ge.s32.totalorder %s11, 4
    %s21 = sphi 0, %s23
    %s24 = sphi 0, %s21
    %s25 = sphi 0, %s24
    %s41 = sphi 0, %s25
    %s45 = sphi 0, %s45
    %s47 = sphi 0, %s45
    %s48 = sphi 0, %s47
    %s62 = sphi 0, %s48
    %s66 = sphi 0, %s66
    %s68 = sphi 0, %s66
    %s69 = sphi 0, %s68
    %s83 = sphi 0, %s69
    %s87 = sphi 0, %s87
    %s89 = sphi 0, %s87
    %s90 = sphi 0, %s89
    %s104 = sphi 0, %s90
    %s108 = sphi 0, %s108
    %s110 = sphi 0, %s108
    %s111 = sphi 0, %s110
    %s125 = sphi 0, %s111
    %s131 = sphi 0, %s133
    %s134 = sphi 0, %s131
    %s135 = sphi 0, %s134
    %s151 = sphi 0, %s135
  $region4: #{resnet_block.1} parent=0 // loop_header_branch
    %14 = sbr.rel (%p12) target = $region8
  $region5: #{resnet_block.1} parent=0 // loop_body
    %s16 = ssub.s32 %s11, 1
    %s17 = ssub.s32 %s11, 2
    %s18 = sadd.s32 %s11, 1
    %s19 = ssub.s32 %s11, %s18
    %p20 = scmp.eq.s32.totalorder %s19, 0
    %s22 = sadd.s32 %s21, 1
    %s23 = scalar_select %p20, %s21, %s22
    %p26 = pneg %p20
    %p27 = scmp.eq.s32.totalorder %s11, 1
    %p28 = por %p26, %p27
    %p29 = scmp.ne.s32.totalorder %s21, %s24
    %p30 = scmp.eq.s32.totalorder %s11, 0
    %p31 = por %p29, %p30
    %p32 = scmp.ne.s32.totalorder %s21, %s24
    %p33 = scmp.eq.s32.totalorder %s16, 1
    %p34 = por %p32, %p33
    %p35 = scmp.ne.s32.totalorder %s24, %s25
    %p36 = scmp.eq.s32.totalorder %s16, 0
    %p37 = por %p35, %p36
    %p38 = scmp.ne.s32.totalorder %s24, %s25
    %p39 = scmp.eq.s32.totalorder %s17, 1
    %p40 = por %p38, %p39
    %p42 = scmp.ne.s32.totalorder %s25, %s41
    %p43 = scmp.eq.s32.totalorder %s17, 0
    %p44 = por %p42, %p43
    %s46 = sadd.s32 %s45, 1
    %p49 = scmp.eq.s32.totalorder %s11, 1
    %p50 = scmp.ne.s32.totalorder %s45, %s47
    %p51 = scmp.eq.s32.totalorder %s11, 0
    %p52 = por %p50, %p51
    %p53 = scmp.ne.s32.totalorder %s45, %s47
    %p54 = scmp.eq.s32.totalorder %s16, 1
    %p55 = por %p53, %p54
    %p56 = scmp.ne.s32.totalorder %s47, %s48
    %p57 = scmp.eq.s32.totalorder %s16, 0
    %p58 = por %p56, %p57
    %p59 = scmp.ne.s32.totalorder %s47, %s48
    %p60 = scmp.eq.s32.totalorder %s17, 1
    %p61 = por %p59, %p60
    %p63 = scmp.ne.s32.totalorder %s48, %s62
    %p64 = scmp.eq.s32.totalorder %s17, 0
    %p65 = por %p63, %p64
    %s67 = sadd.s32 %s66, 1
    %p70 = scmp.eq.s32.totalorder %s11, 1
    %p71 = scmp.ne.s32.totalorder %s66, %s68
    %p72 = scmp.eq.s32.totalorder %s11, 0
    %p73 = por %p71, %p72
    %p74 = scmp.ne.s32.totalorder %s66, %s68
    %p75 = scmp.eq.s32.totalorder %s16, 1
    %p76 = por %p74, %p75
    %p77 = scmp.ne.s32.totalorder %s68, %s69
    %p78 = scmp.eq.s32.totalorder %s16, 0
    %p79 = por %p77, %p78
    %p80 = scmp.ne.s32.totalorder %s68, %s69
    %p81 = scmp.eq.s32.totalorder %s17, 1
    %p82 = por %p80, %p81
    %p84 = scmp.ne.s32.totalorder %s69, %s83
    %p85 = scmp.eq.s32.totalorder %s17, 0
    %p86 = por %p84, %p85
    %s88 = sadd.s32 %s87, 1
    %p91 = scmp.eq.s32.totalorder %s11, 1
    %p92 = scmp.ne.s32.totalorder %s87, %s89
    %p93 = scmp.eq.s32.totalorder %s11, 0
    %p94 = por %p92, %p93
    %p95 = scmp.ne.s32.totalorder %s87, %s89
    %p96 = scmp.eq.s32.totalorder %s16, 1
    %p97 = por %p95, %p96
    %p98 = scmp.ne.s32.totalorder %s89, %s90
    %p99 = scmp.eq.s32.totalorder %s16, 0
    %p100 = por %p98, %p99
    %p101 = scmp.ne.s32.totalorder %s89, %s90
    %p102 = scmp.eq.s32.totalorder %s17, 1
    %p103 = por %p101, %p102
    %p105 = scmp.ne.s32.totalorder %s90, %s104
    %p106 = scmp.eq.s32.totalorder %s17, 0
    %p107 = por %p105, %p106
    %s109 = sadd.s32 %s108, 1
    %p112 = scmp.eq.s32.totalorder %s11, 1
    %p113 = scmp.ne.s32.totalorder %s108, %s110
    %p114 = scmp.eq.s32.totalorder %s11, 0
    %p115 = por %p113, %p114
    %p116 = scmp.ne.s32.totalorder %s108, %s110
    %p117 = scmp.eq.s32.totalorder %s16, 1
    %p118 = por %p116, %p117
    %p119 = scmp.ne.s32.totalorder %s110, %s111
    %p120 = scmp.eq.s32.totalorder %s16, 0
    %p121 = por %p119, %p120
    %p122 = scmp.ne.s32.totalorder %s110, %s111
    %p123 = scmp.eq.s32.totalorder %s17, 1
    %p124 = por %p122, %p123
    %p126 = scmp.ne.s32.totalorder %s111, %s125
    %p127 = scmp.eq.s32.totalorder %s17, 0
    %p128 = por %p126, %p127
    %s129 = ssub.s32 %s11, %s18
    %p130 = scmp.eq.s32.totalorder %s129, 0
    %s132 = sadd.s32 %s131, 1
    %s133 = scalar_select %p130, %s131, %s132
    %p136 = pneg %p130
    %p137 = scmp.eq.s32.totalorder %s11, 1
    %p138 = por %p136, %p137
    %p139 = scmp.ne.s32.totalorder %s131, %s134
    %p140 = scmp.eq.s32.totalorder %s11, 0
    %p141 = por %p139, %p140
    %p142 = scmp.ne.s32.totalorder %s131, %s134
    %p143 = scmp.eq.s32.totalorder %s16, 1
    %p144 = por %p142, %p143
    %p145 = scmp.ne.s32.totalorder %s134, %s135
    %p146 = scmp.eq.s32.totalorder %s16, 0
    %p147 = por %p145, %p146
    %p148 = scmp.ne.s32.totalorder %s134, %s135
    %p149 = scmp.eq.s32.totalorder %s17, 1
    %p150 = por %p148, %p149
    %p152 = scmp.ne.s32.totalorder %s135, %s151
    %p153 = scmp.eq.s32.totalorder %s17, 0
    %p154 = por %p152, %p153
    %p155 = scmp.le.s32.totalorder 1, %s11
    %p156 = scmp.lt.s32.totalorder %s11, 3
    %p157 = pnand %p155, %p156
    %p158 = pneg %p157
    // Predicated region
    $region9: #{resnet_block.1} parent=5 // pred_check
      _
    $region10: #{resnet_block.1} parent=5 // pred_check_branch
      %160 = sbr.rel (%p157) target = $region12
    $region11: #{resnet_block.1} parent=5 // pred_region
      %s161 = ssub.s32 %s11, 1
      // Predicated region
      $region13: #{resnet_block.1} parent=11 // pred_check
        %p162 = pneg %p58
      $region14: #{resnet_block.1} parent=11 // pred_check_branch
        %164 = sbr.rel (%p162) target = $region16
      $region15: #{resnet_block.1} parent=11 // pred_region
        _
      $region16: #{resnet_block.1} parent=11 // pred_fallthru
        _
      // Predicated region
      $region17: #{resnet_block.1} parent=11 // pred_check
        %p165 = pneg %p79
      $region18: #{resnet_block.1} parent=11 // pred_check_branch
        %167 = sbr.rel (%p165) target = $region20
      $region19: #{resnet_block.1} parent=11 // pred_region
        _
      $region20: #{resnet_block.1} parent=11 // pred_fallthru
        _
      // Predicated region
      $region21: #{resnet_block.1} parent=11 // pred_check
        %p168 = pneg %p100
      $region22: #{resnet_block.1} parent=11 // pred_check_branch
        %170 = sbr.rel (%p168) target = $region24
      $region23: #{resnet_block.1} parent=11 // pred_region
        _
      $region24: #{resnet_block.1} parent=11 // pred_fallthru
        _
      // Predicated region
      $region25: #{resnet_block.1} parent=11 // pred_check
        %p171 = pneg %p121
      $region26: #{resnet_block.1} parent=11 // pred_check_branch
        %173 = sbr.rel (%p171) target = $region28
      $region27: #{resnet_block.1} parent=11 // pred_region
        _
      $region28: #{resnet_block.1} parent=11 // pred_fallthru
        _
    $region12: #{resnet_block.1} parent=5 // pred_fallthru
      _
    %p174 = scmp.lt.s32.totalorder %s11, 2
    // Predicated region
    $region29: #{resnet_block.1} parent=5 // pred_check
      %p175 = pneg %p174
    $region30: #{resnet_block.1} parent=5 // pred_check_branch
      %177 = sbr.rel (%p175) target = $region32
    $region31: #{resnet_block.1} parent=5 // pred_region
      // Predicated region
      $region33: #{resnet_block.1} parent=31 // pred_check
        %p178 = pneg %p31
      $region34: #{resnet_block.1} parent=31 // pred_check_branch
        %180 = sbr.rel (%p178) target = $region36
      $region35: #{resnet_block.1} parent=31 // pred_region
        %p181 = scmp.lt.s32.totalorder %s11, 1
        %s182 = scalar_select %p181, %s11, 1
        %s183 = smul.addr %s182, 2
        %s184 = smul.addr %s183, 4
        %s185 = scalar_lea.vmem %s0, %s184
      $region36: #{resnet_block.1} parent=31 // pred_fallthru
        _
    $region32: #{resnet_block.1} parent=5 // pred_fallthru
      _
    %p186 = scmp.le.s32.totalorder 1, %s11
    %p187 = scmp.lt.s32.totalorder %s11, 3
    %p188 = pnand %p186, %p187
    %p189 = pneg %p188
    // Predicated region
    $region37: #{resnet_block.1} parent=5 // pred_check
      _
    $region38: #{resnet_block.1} parent=5 // pred_check_branch
      %191 = sbr.rel (%p188) target = $region40
    $region39: #{resnet_block.1} parent=5 // pred_region
      %s192 = ssub.s32 %s11, 1
      %p193 = scmp.lt.s32.totalorder %s16, 1
      %s194 = scalar_select %p193, %s16, 1
      %s195 = smul.addr %s194, 2
      %s196 = smul.addr %s195, 4
      %s197 = scalar_lea.vmem %s0, %s196
      %p198 = pneg %p37
      %p199 = pneg %p34
      %p200 = pneg %p58
      %p201 = pneg %p55
      %p202 = pneg %p79
      %p203 = pneg %p76
      %p204 = pneg %p100
      %p205 = pneg %p97
      %p206 = pneg %p121
      %p207 = pneg %p118
      %p208 = pneg %p147
      %p209 = pneg %p144
      %p210 = scmp.lt.s32.totalorder %s16, 1
      %s211 = scalar_select %p210, %s16, 1
      %s212 = smul.addr %s211, 2
      %s213 = smul.addr %s212, 4
      %s214 = scalar_lea.vmem %s5, %s213
      %p215 = scmp.lt.s32.totalorder %s16, 1
      %s216 = scalar_select %p215, %s16, 1
      %s217 = smul.addr %s216, 2
      %s218 = smul.addr %s217, 4
      %s219 = scalar_lea.vmem %s0, %s218
      %p220 = scmp.lt.s32.totalorder %s16, 1
      %s221 = scalar_select %p220, %s16, 1
      %s222 = smul.addr %s221, 2
      %s223 = smul.addr %s222, 4
      %s224 = scalar_lea.vmem %s5, %s223
      %v226 = vlaneseq
      %v227 = vand.u32 %v226, 127
      %v228 = vadd.s32 %v227, 128
      %vm229 = vcmp.lt.s32.totalorder %v227, 0
      %v230 = vsub.s32 0, %v227
      %v231 = vsel %vm229, %v230, %v227
      %v232 = vshrl.u32 %v231, 4
      %v233 = vand.u32 %v231, 15
      %v234 = vsub.s32 0, %v233
      %v235 = vsel %vm229, %v234, %v233
      %vm236 = vcmp.lt.s32.totalorder %v228, 0
      %v237 = vsub.s32 0, %v228
      %v238 = vsel %vm236, %v237, %v228
      %v239 = vshrl.u32 %v238, 4
      %v240 = vand.u32 %v238, 15
      %v241 = vsub.s32 0, %v240
      %v242 = vsel %vm236, %v241, %v240
      %vm243 = vcmp.ne.s32.totalorder %v235, 0
      %vm244 = vcmp.ne.s32.totalorder %v242, 0
      %vm245 = vcmp.lt.s32.totalorder %v235, 0
      %vm246 = vcmp.lt.s32.totalorder %v242, 0
      %vm247 = vmand %vm245, %vm243
      %vm248 = vmand %vm246, %vm244
      %v249 = vadd.s32 %v235, 16
      %v250 = vadd.s32 %v242, 16
      %v251 = vsel %vm247, %v249, %v235
      %v252 = vsel %vm248, %v250, %v242
      %vm253 = vcmp.eq.s32.totalorder %v251, 0
      %vm254 = vcmp.eq.s32.totalorder %v252, 0
      %vm255 = vcmp.eq.s32.totalorder %v251, 15
      %vm256 = vcmp.eq.s32.totalorder %v252, 15
      %vm257 = vcmp.lt.s32.totalorder %v227, 16
      %vm258 = vcmp.lt.s32.totalorder %v228, 16
      %vm259 = vcmp.ge.s32.totalorder %v227, 240
      %vm260 = vcmp.ge.s32.totalorder %v228, 240
      %v261 = vld [vmem:[%s219] sm:$0xff]
      %v263 = vcombine.high %v261, %v261
      %265 = vrot.lane.b32.xlu0 %v261, 127
      %v266 = vpop.permute.xlu0 %265
      %267 = vrot.lane.b32.xlu0 %v263, 127
      %v268 = vpop.permute.xlu0 %267
      %vm269 = vcmp.lt.s32.totalorder %v227, 127
      %v270 = vsel %vm269, %v266, %v268
      %v271 = vsel %vm269, %v268, %v266
      %272 = vrot.lane.b32.xlu0 %v261, 1
      %v273 = vpop.permute.xlu0 %272
      %274 = vrot.lane.b32.xlu0 %v263, 1
      %v275 = vpop.permute.xlu0 %274
      %vm276 = vcmp.lt.s32.totalorder %v227, 1
      %v277 = vsel %vm276, %v273, %v275
      %v278 = vsel %vm276, %v275, %v273
      %v279 = vsel %vm253, 1, 0
      %v280 = vsel %vm254, 1, 0
      %vm281 = vcmp.eq.s32.totalorder %v279, 1
      %vm282 = vcmp.eq.s32.totalorder %v280, 1
      %v283 = vsel %vm281, %v270, %v278
      %v284 = vsel %vm282, %v271, %v277
      %v285 = vsel %vm255, 1, 0
      %v286 = vsel %vm256, 1, 0
      %vm287 = vcmp.eq.s32.totalorder %v285, 1
      %vm288 = vcmp.eq.s32.totalorder %v286, 1
      %v289 = vsel %vm287, %v278, %v270
      %v290 = vsel %vm288, %v277, %v271
      %291 = vrot.lane.b32.xlu0 %v283, 112
      %v292 = vpop.permute.xlu0 %291
      %293 = vrot.lane.b32.xlu0 %v284, 112
      %v294 = vpop.permute.xlu0 %293
      %vm295 = vcmp.lt.s32.totalorder %v227, 112
      %v296 = vsel %vm295, %v292, %v294
      %v297 = vsel %vm295, %v294, %v292
      %298 = vrot.lane.b32.xlu0 %v283, 16
      %v299 = vpop.permute.xlu0 %298
      %300 = vrot.lane.b32.xlu0 %v284, 16
      %v301 = vpop.permute.xlu0 %300
      %v302 = vsel %vm257, %v299, %v301
      %v303 = vsel %vm257, %v301, %v299
      %v304 = vsel %vm257, 1, 0
      %v305 = vsel %vm258, 1, 0
      %vm306 = vcmp.eq.s32.totalorder %v304, 1
      %vm307 = vcmp.eq.s32.totalorder %v305, 1
      %v308 = vsel %vm306, %v296, %v303
      %v309 = vsel %vm307, %v297, %v302
      %v310 = vsel %vm259, 1, 0
      %v311 = vsel %vm260, 1, 0
      %vm312 = vcmp.eq.s32.totalorder %v310, 1
      %vm313 = vcmp.eq.s32.totalorder %v311, 1
      %v314 = vsel %vm312, %v303, %v296
      %v315 = vsel %vm313, %v302, %v297
      %v318 = vrot.slane %v283, 4
      %v319 = vrot.slane %v284, 4
      %vm322 = vcmask 1043456
      %v323 = vsel %vm322, %v308, %v318
      %v324 = vsel %vm322, %v309, %v319
      %v325 = vpack.c.bf16 %v314, %v323
      %v326 = vpack.c.bf16 %v315, %v324
      %v327 = vld [vmem:[%s1] sm:$0x3]
      %328 = vrot.lane.b32.xlu0 %v261, 112
      %v329 = vpop.permute.xlu0 %328
      %330 = vrot.lane.b32.xlu0 %v263, 112
      %v331 = vpop.permute.xlu0 %330
      %v332 = vsel %vm295, %v329, %v331
      %v333 = vsel %vm295, %v331, %v329
      %334 = vrot.lane.b32.xlu0 %v261, 16
      %v335 = vpop.permute.xlu0 %334
      %336 = vrot.lane.b32.xlu0 %v263, 16
      %v337 = vpop.permute.xlu0 %336
      %v338 = vsel %vm257, %v335, %v337
      %v339 = vsel %vm257, %v337, %v335
      %v340 = vsel %vm306, %v332, %v339
      %v341 = vsel %vm307, %v333, %v338
      %v342 = vsel %vm312, %v339, %v332
      %v343 = vsel %vm313, %v338, %v333
      %v344 = vcombine.low %v261, %v261
      %v346 = vsel %vm322, %v340, %v344
      %v347 = vsel %vm322, %v341, %v261
      %v348 = vpack.c.bf16 %v342, %v346
      %v349 = vpack.c.bf16 %v343, %v347
      %s350 = scalar_lea.vmem %s1, 2
      %v351 = vld [vmem:[%s350] sm:$0x3]
      %vm352 = vcmask 97280
      %v354 = vsel %vm352, %v351, 0
      %vm356 = vcmask 1045504
      %v358 = vsel %vm356, %v348, 0
      %v361 = vsel %vm356, %v349, 0
      %363 = vmatprep.subr.bf16.mxu0 0
      %364 = vmatpush1.bf16.msra.mxu0 0
      %365 = vmatprep.subr.bf16.mxu0 0
      %366 = vmatpush1.bf16.msra.mxu0 0
      %367 = vmatprep.subr.bf16.mxu0 0
      %368 = vmatpush1.bf16.msra.mxu0 0
      %369 = vmatprep.subr.bf16.mxu0 0
      %370 = vmatpush1.bf16.msra.mxu0 0
      %371 = vmatprep.subr.bf16.mxu0 0
      %372 = vmatpush1.bf16.msra.mxu0 0
      %373 = vmatprep.subr.bf16.mxu0 0
      %374 = vmatpush1.bf16.msra.mxu0 0
      %375 = vmatprep.subr.bf16.mxu0 0
      %376 = vmatpush1.bf16.msra.mxu0 0
      %377 = vmatprep.subr.bf16.mxu0 %v361
      %378 = vmatpush1.bf16.msra.mxu0 %v358
      %379 = vmatprep.subr.bf16.mxu0 0
      %380 = vmatpush2.bf16.msra.mxu0 0
      %381 = vmatprep.subr.bf16.mxu0 0
      %382 = vmatpush2.bf16.msra.mxu0 0
      %383 = vmatprep.subr.bf16.mxu0 0
      %384 = vmatpush2.bf16.msra.mxu0 0
      %385 = vmatprep.subr.bf16.mxu0 0
      %386 = vmatpush2.bf16.msra.mxu0 0
      %387 = vmatprep.subr.bf16.mxu0 0
      %388 = vmatpush2.bf16.msra.mxu0 0
      %389 = vmatprep.subr.bf16.mxu0 0
      %390 = vmatpush2.bf16.msra.mxu0 0
      %391 = vmatprep.subr.bf16.mxu0 0
      %392 = vmatpush2.bf16.msra.mxu0 0
      %393 = vmatprep.subr.bf16.mxu0 0
      %394 = vmatpush2.bf16.msra.mxu0 0
      %395 = vmatprep.mubr.bf16.mxu0 0
      %396 = vmatmul.mubr.bf16.gmra.mxu0 %v354
      %v397 = vpop.f32.mrf.mxu0
      %v398 = vadd.f32 0.0, %v397
      %v399 = vpop.f32.mrf.mxu0
      %v400 = vadd.f32 0.0, %v399
      %v401 = vpop.f32.mrf.mxu0
      %v402 = vpop.f32.mrf.mxu0
      %403 = vdwg.mxu0
      %v405 = vsel %vm352, %v327, 0
      %v408 = vsel %vm356, %v325, 0
      %v411 = vsel %vm356, %v326, 0
      %413 = vmatprep.subr.bf16.mxu0 0
      %414 = vmatpush1.bf16.msra.mxu0 0
      %415 = vmatprep.subr.bf16.mxu0 0
      %416 = vmatpush1.bf16.msra.mxu0 0
      %417 = vmatprep.subr.bf16.mxu0 0
      %418 = vmatpush1.bf16.msra.mxu0 0
      %419 = vmatprep.subr.bf16.mxu0 0
      %420 = vmatpush1.bf16.msra.mxu0 0
      %421 = vmatprep.subr.bf16.mxu0 0
      %422 = vmatpush1.bf16.msra.mxu0 0
      %423 = vmatprep.subr.bf16.mxu0 0
      %424 = vmatpush1.bf16.msra.mxu0 0
      %425 = vmatprep.subr.bf16.mxu0 0
      %426 = vmatpush1.bf16.msra.mxu0 0
      %427 = vmatprep.subr.bf16.mxu0 %v411
      %428 = vmatpush1.bf16.msra.mxu0 %v408
      %429 = vmatprep.subr.bf16.mxu0 0
      %430 = vmatpush2.bf16.msra.mxu0 0
      %431 = vmatprep.subr.bf16.mxu0 0
      %432 = vmatpush2.bf16.msra.mxu0 0
      %433 = vmatprep.subr.bf16.mxu0 0
      %434 = vmatpush2.bf16.msra.mxu0 0
      %435 = vmatprep.subr.bf16.mxu0 0
      %436 = vmatpush2.bf16.msra.mxu0 0
      %437 = vmatprep.subr.bf16.mxu0 0
      %438 = vmatpush2.bf16.msra.mxu0 0
      %439 = vmatprep.subr.bf16.mxu0 0
      %440 = vmatpush2.bf16.msra.mxu0 0
      %441 = vmatprep.subr.bf16.mxu0 0
      %442 = vmatpush2.bf16.msra.mxu0 0
      %443 = vmatprep.subr.bf16.mxu0 0
      %444 = vmatpush2.bf16.msra.mxu0 0
      %445 = vmatprep.mubr.bf16.mxu0 0
      %446 = vmatmul.mubr.bf16.gmra.mxu0 %v405
      %v447 = vpop.f32.mrf.mxu0
      %v448 = vadd.f32 %v398, %v447
      %v449 = vpop.f32.mrf.mxu0
      %v450 = vadd.f32 %v400, %v449
      %v451 = vpop.f32.mrf.mxu0
      %v452 = vpop.f32.mrf.mxu0
      %453 = vdwg.mxu0
      %454 = vrot.lane.b32.xlu0 %v289, 112
      %v455 = vpop.permute.xlu0 %454
      %456 = vrot.lane.b32.xlu0 %v290, 112
      %v457 = vpop.permute.xlu0 %456
      %v458 = vsel %vm295, %v455, %v457
      %v459 = vsel %vm295, %v457, %v455
      %460 = vrot.lane.b32.xlu0 %v289, 16
      %v461 = vpop.permute.xlu0 %460
      %462 = vrot.lane.b32.xlu0 %v290, 16
      %v463 = vpop.permute.xlu0 %462
      %v464 = vsel %vm257, %v461, %v463
      %v465 = vsel %vm257, %v463, %v461
      %v466 = vsel %vm306, %v458, %v465
      %v467 = vsel %vm307, %v459, %v464
      %v468 = vsel %vm312, %v465, %v458
      %v469 = vsel %vm313, %v464, %v459
      %v472 = vrot.slane %v289, 4
      %v473 = vrot.slane %v290, 4
      %v476 = vsel %vm322, %v466, %v472
      %v477 = vsel %vm322, %v467, %v473
      %v478 = vpack.c.bf16 %v468, %v476
      %v479 = vpack.c.bf16 %v469, %v477
      %s480 = scalar_lea.vmem %s1, 4
      %v481 = vld [vmem:[%s480] sm:$0x3]
      %v483 = vsel %vm352, %v481, 0
      %v486 = vsel %vm356, %v478, 0
      %v489 = vsel %vm356, %v479, 0
      %491 = vmatprep.subr.bf16.mxu0 0
      %492 = vmatpush1.bf16.msra.mxu0 0
      %493 = vmatprep.subr.bf16.mxu0 0
      %494 = vmatpush1.bf16.msra.mxu0 0
      %495 = vmatprep.subr.bf16.mxu0 0
      %496 = vmatpush1.bf16.msra.mxu0 0
      %497 = vmatprep.subr.bf16.mxu0 0
      %498 = vmatpush1.bf16.msra.mxu0 0
      %499 = vmatprep.subr.bf16.mxu0 0
      %500 = vmatpush1.bf16.msra.mxu0 0
      %501 = vmatprep.subr.bf16.mxu0 0
      %502 = vmatpush1.bf16.msra.mxu0 0
      %503 = vmatprep.subr.bf16.mxu0 0
      %504 = vmatpush1.bf16.msra.mxu0 0
      %505 = vmatprep.subr.bf16.mxu0 %v489
      %506 = vmatpush1.bf16.msra.mxu0 %v486
      %507 = vmatprep.subr.bf16.mxu0 0
      %508 = vmatpush2.bf16.msra.mxu0 0
      %509 = vmatprep.subr.bf16.mxu0 0
      %510 = vmatpush2.bf16.msra.mxu0 0
      %511 = vmatprep.subr.bf16.mxu0 0
      %512 = vmatpush2.bf16.msra.mxu0 0
      %513 = vmatprep.subr.bf16.mxu0 0
      %514 = vmatpush2.bf16.msra.mxu0 0
      %515 = vmatprep.subr.bf16.mxu0 0
      %516 = vmatpush2.bf16.msra.mxu0 0
      %517 = vmatprep.subr.bf16.mxu0 0
      %518 = vmatpush2.bf16.msra.mxu0 0
      %519 = vmatprep.subr.bf16.mxu0 0
      %520 = vmatpush2.bf16.msra.mxu0 0
      %521 = vmatprep.subr.bf16.mxu0 0
      %522 = vmatpush2.bf16.msra.mxu0 0
      %523 = vmatprep.mubr.bf16.mxu0 0
      %524 = vmatmul.mubr.bf16.gmra.mxu0 %v483
      %v525 = vpop.f32.mrf.mxu0
      %v526 = vadd.f32 0.0, %v525
      %v527 = vpop.f32.mrf.mxu0
      %v528 = vadd.f32 0.0, %v527
      %v529 = vpop.f32.mrf.mxu0
      %v530 = vpop.f32.mrf.mxu0
      %531 = vdwg.mxu0
      %v532 = vadd.f32 %v448, %v526
      %v533 = vadd.f32 %v450, %v528
      %v534 = vld [vmem:[%s2] sm:$0xf]
      %536 = vset.pattern.permute.xlu0 0
      %537 = vperm.xlu0 %536, %v534
      %v538 = vpop.permute.xlu0 %537
      %v540 = vadd.f32 %v532, %v538
      %v541 = vadd.f32 %v533, %v538
      %v542 = vsel %vm322, %v540, 0.0
      %v543 = vsel %vm322, %v541, 0.0
      %v544 = vadd.f32 %v542, %v543
      %545 = vadd.xlane.f32.xlu0 %v544
      %v546 = vpop.xlane.xlu0 %545
      %v547 = vrcp.pop 256.0
      %v548 = vmul.f32 %v546, %v547
      %v549 = vsub.f32 %v540, %v548
      %v550 = vsub.f32 %v541, %v548
      %v551 = vmul.f32 %v549, %v549
      %v552 = vmul.f32 %v550, %v550
      %v553 = vsel %vm322, %v551, 0.0
      %v554 = vsel %vm322, %v552, 0.0
      %v555 = vadd.f32 %v553, %v554
      %556 = vadd.xlane.f32.xlu0 %v555
      %v557 = vpop.xlane.xlu0 %556
      %v558 = vmul.f32 %v557, %v547
      %v559 = vadd.f32 %v558, 1e-05
      %v560 = vrsqrt.pop %v559
      %v561 = vmul.f32 %v549, %v560
      %v562 = vmul.f32 %v550, %v560
      %v563 = vmax.f32 %v561, 0.0
      %v564 = vmax.f32 %v562, 0.0
      %565 = vrot.lane.b32.xlu0 %v563, 127
      %v566 = vpop.permute.xlu0 %565
      %567 = vrot.lane.b32.xlu0 %v564, 127
      %v568 = vpop.permute.xlu0 %567
      %v569 = vsel %vm269, %v566, %v568
      %v570 = vsel %vm269, %v568, %v566
      %571 = vrot.lane.b32.xlu0 %v563, 1
      %v572 = vpop.permute.xlu0 %571
      %573 = vrot.lane.b32.xlu0 %v564, 1
      %v574 = vpop.permute.xlu0 %573
      %v575 = vsel %vm276, %v572, %v574
      %v576 = vsel %vm276, %v574, %v572
      %v577 = vsel %vm281, %v569, %v576
      %v578 = vsel %vm282, %v570, %v575
      %v579 = vsel %vm287, %v576, %v569
      %v580 = vsel %vm288, %v575, %v570
      %581 = vrot.lane.b32.xlu0 %v577, 112
      %v582 = vpop.permute.xlu0 %581
      %583 = vrot.lane.b32.xlu0 %v578, 112
      %v584 = vpop.permute.xlu0 %583
      %v585 = vsel %vm295, %v582, %v584
      %v586 = vsel %vm295, %v584, %v582
      %587 = vrot.lane.b32.xlu0 %v577, 16
      %v588 = vpop.permute.xlu0 %587
      %589 = vrot.lane.b32.xlu0 %v578, 16
      %v590 = vpop.permute.xlu0 %589
      %v591 = vsel %vm257, %v588, %v590
      %v592 = vsel %vm257, %v590, %v588
      %v593 = vsel %vm306, %v585, %v592
      %v594 = vsel %vm307, %v586, %v591
      %v595 = vsel %vm312, %v592, %v585
      %v596 = vsel %vm313, %v591, %v586
      %v599 = vrot.slane %v577, 4
      %v600 = vrot.slane %v578, 4
      %v603 = vsel %vm322, %v593, %v599
      %v604 = vsel %vm322, %v594, %v600
      %v605 = vpack.c.bf16 %v595, %v603
      %v606 = vpack.c.bf16 %v596, %v604
      %v607 = vld [vmem:[%s3] sm:$0x3]
      %608 = vrot.lane.b32.xlu0 %v563, 112
      %v609 = vpop.permute.xlu0 %608
      %610 = vrot.lane.b32.xlu0 %v564, 112
      %v611 = vpop.permute.xlu0 %610
      %v612 = vsel %vm295, %v609, %v611
      %v613 = vsel %vm295, %v611, %v609
      %614 = vrot.lane.b32.xlu0 %v563, 16
      %v615 = vpop.permute.xlu0 %614
      %616 = vrot.lane.b32.xlu0 %v564, 16
      %v617 = vpop.permute.xlu0 %616
      %v618 = vsel %vm257, %v615, %v617
      %v619 = vsel %vm257, %v617, %v615
      %v620 = vsel %vm306, %v612, %v619
      %v621 = vsel %vm307, %v613, %v618
      %v622 = vsel %vm312, %v619, %v612
      %v623 = vsel %vm313, %v618, %v613
      %v626 = vrot.slane %v563, 4
      %v627 = vrot.slane %v564, 4
      %v630 = vsel %vm322, %v620, %v626
      %v631 = vsel %vm322, %v621, %v627
      %v632 = vpack.c.bf16 %v622, %v630
      %v633 = vpack.c.bf16 %v623, %v631
      %s634 = scalar_lea.vmem %s3, 2
      %v635 = vld [vmem:[%s634] sm:$0x3]
      %v637 = vsel %vm352, %v635, 0
      %v640 = vsel %vm356, %v632, 0
      %v643 = vsel %vm356, %v633, 0
      %645 = vmatprep.subr.bf16.mxu0 0
      %646 = vmatpush1.bf16.msra.mxu0 0
      %647 = vmatprep.subr.bf16.mxu0 0
      %648 = vmatpush1.bf16.msra.mxu0 0
      %649 = vmatprep.subr.bf16.mxu0 0
      %650 = vmatpush1.bf16.msra.mxu0 0
      %651 = vmatprep.subr.bf16.mxu0 0
      %652 = vmatpush1.bf16.msra.mxu0 0
      %653 = vmatprep.subr.bf16.mxu0 0
      %654 = vmatpush1.bf16.msra.mxu0 0
      %655 = vmatprep.subr.bf16.mxu0 0
      %656 = vmatpush1.bf16.msra.mxu0 0
      %657 = vmatprep.subr.bf16.mxu0 0
      %658 = vmatpush1.bf16.msra.mxu0 0
      %659 = vmatprep.subr.bf16.mxu0 %v643
      %660 = vmatpush1.bf16.msra.mxu0 %v640
      %661 = vmatprep.subr.bf16.mxu0 0
      %662 = vmatpush2.bf16.msra.mxu0 0
      %663 = vmatprep.subr.bf16.mxu0 0
      %664 = vmatpush2.bf16.msra.mxu0 0
      %665 = vmatprep.subr.bf16.mxu0 0
      %666 = vmatpush2.bf16.msra.mxu0 0
      %667 = vmatprep.subr.bf16.mxu0 0
      %668 = vmatpush2.bf16.msra.mxu0 0
      %669 = vmatprep.subr.bf16.mxu0 0
      %670 = vmatpush2.bf16.msra.mxu0 0
      %671 = vmatprep.subr.bf16.mxu0 0
      %672 = vmatpush2.bf16.msra.mxu0 0
      %673 = vmatprep.subr.bf16.mxu0 0
      %674 = vmatpush2.bf16.msra.mxu0 0
      %675 = vmatprep.subr.bf16.mxu0 0
      %676 = vmatpush2.bf16.msra.mxu0 0
      %677 = vmatprep.mubr.bf16.mxu0 0
      %678 = vmatmul.mubr.bf16.gmra.mxu0 %v637
      %v679 = vpop.f32.mrf.mxu0
      %v680 = vadd.f32 0.0, %v679
      %v681 = vpop.f32.mrf.mxu0
      %v682 = vadd.f32 0.0, %v681
      %v683 = vpop.f32.mrf.mxu0
      %v684 = vpop.f32.mrf.mxu0
      %685 = vdwg.mxu0
      %v687 = vsel %vm352, %v607, 0
      %v690 = vsel %vm356, %v605, 0
      %v693 = vsel %vm356, %v606, 0
      %695 = vmatprep.subr.bf16.mxu0 0
      %696 = vmatpush1.bf16.msra.mxu0 0
      %697 = vmatprep.subr.bf16.mxu0 0
      %698 = vmatpush1.bf16.msra.mxu0 0
      %699 = vmatprep.subr.bf16.mxu0 0
      %700 = vmatpush1.bf16.msra.mxu0 0
      %701 = vmatprep.subr.bf16.mxu0 0
      %702 = vmatpush1.bf16.msra.mxu0 0
      %703 = vmatprep.subr.bf16.mxu0 0
      %704 = vmatpush1.bf16.msra.mxu0 0
      %705 = vmatprep.subr.bf16.mxu0 0
      %706 = vmatpush1.bf16.msra.mxu0 0
      %707 = vmatprep.subr.bf16.mxu0 0
      %708 = vmatpush1.bf16.msra.mxu0 0
      %709 = vmatprep.subr.bf16.mxu0 %v693
      %710 = vmatpush1.bf16.msra.mxu0 %v690
      %711 = vmatprep.subr.bf16.mxu0 0
      %712 = vmatpush2.bf16.msra.mxu0 0
      %713 = vmatprep.subr.bf16.mxu0 0
      %714 = vmatpush2.bf16.msra.mxu0 0
      %715 = vmatprep.subr.bf16.mxu0 0
      %716 = vmatpush2.bf16.msra.mxu0 0
      %717 = vmatprep.subr.bf16.mxu0 0
      %718 = vmatpush2.bf16.msra.mxu0 0
      %719 = vmatprep.subr.bf16.mxu0 0
      %720 = vmatpush2.bf16.msra.mxu0 0
      %721 = vmatprep.subr.bf16.mxu0 0
      %722 = vmatpush2.bf16.msra.mxu0 0
      %723 = vmatprep.subr.bf16.mxu0 0
      %724 = vmatpush2.bf16.msra.mxu0 0
      %725 = vmatprep.subr.bf16.mxu0 0
      %726 = vmatpush2.bf16.msra.mxu0 0
      %727 = vmatprep.mubr.bf16.mxu0 0
      %728 = vmatmul.mubr.bf16.gmra.mxu0 %v687
      %v729 = vpop.f32.mrf.mxu0
      %v730 = vadd.f32 %v680, %v729
      %v731 = vpop.f32.mrf.mxu0
      %v732 = vadd.f32 %v682, %v731
      %v733 = vpop.f32.mrf.mxu0
      %v734 = vpop.f32.mrf.mxu0
      %735 = vdwg.mxu0
      %736 = vrot.lane.b32.xlu0 %v579, 112
      %v737 = vpop.permute.xlu0 %736
      %738 = vrot.lane.b32.xlu0 %v580, 112
      %v739 = vpop.permute.xlu0 %738
      %v740 = vsel %vm295, %v737, %v739
      %v741 = vsel %vm295, %v739, %v737
      %742 = vrot.lane.b32.xlu0 %v579, 16
      %v743 = vpop.permute.xlu0 %742
      %744 = vrot.lane.b32.xlu0 %v580, 16
      %v745 = vpop.permute.xlu0 %744
      %v746 = vsel %vm257, %v743, %v745
      %v747 = vsel %vm257, %v745, %v743
      %v748 = vsel %vm306, %v740, %v747
      %v749 = vsel %vm307, %v741, %v746
      %v750 = vsel %vm312, %v747, %v740
      %v751 = vsel %vm313, %v746, %v741
      %v754 = vrot.slane %v579, 4
      %v755 = vrot.slane %v580, 4
      %v758 = vsel %vm322, %v748, %v754
      %v759 = vsel %vm322, %v749, %v755
      %v760 = vpack.c.bf16 %v750, %v758
      %v761 = vpack.c.bf16 %v751, %v759
      %s762 = scalar_lea.vmem %s3, 4
      %v763 = vld [vmem:[%s762] sm:$0x3]
      %v765 = vsel %vm352, %v763, 0
      %v768 = vsel %vm356, %v760, 0
      %v771 = vsel %vm356, %v761, 0
      %773 = vmatprep.subr.bf16.mxu0 0
      %774 = vmatpush1.bf16.msra.mxu0 0
      %775 = vmatprep.subr.bf16.mxu0 0
      %776 = vmatpush1.bf16.msra.mxu0 0
      %777 = vmatprep.subr.bf16.mxu0 0
      %778 = vmatpush1.bf16.msra.mxu0 0
      %779 = vmatprep.subr.bf16.mxu0 0
      %780 = vmatpush1.bf16.msra.mxu0 0
      %781 = vmatprep.subr.bf16.mxu0 0
      %782 = vmatpush1.bf16.msra.mxu0 0
      %783 = vmatprep.subr.bf16.mxu0 0
      %784 = vmatpush1.bf16.msra.mxu0 0
      %785 = vmatprep.subr.bf16.mxu0 0
      %786 = vmatpush1.bf16.msra.mxu0 0
      %787 = vmatprep.subr.bf16.mxu0 %v771
      %788 = vmatpush1.bf16.msra.mxu0 %v768
      %789 = vmatprep.subr.bf16.mxu0 0
      %790 = vmatpush2.bf16.msra.mxu0 0
      %791 = vmatprep.subr.bf16.mxu0 0
      %792 = vmatpush2.bf16.msra.mxu0 0
      %793 = vmatprep.subr.bf16.mxu0 0
      %794 = vmatpush2.bf16.msra.mxu0 0
      %795 = vmatprep.subr.bf16.mxu0 0
      %796 = vmatpush2.bf16.msra.mxu0 0
      %797 = vmatprep.subr.bf16.mxu0 0
      %798 = vmatpush2.bf16.msra.mxu0 0
      %799 = vmatprep.subr.bf16.mxu0 0
      %800 = vmatpush2.bf16.msra.mxu0 0
      %801 = vmatprep.subr.bf16.mxu0 0
      %802 = vmatpush2.bf16.msra.mxu0 0
      %803 = vmatprep.subr.bf16.mxu0 0
      %804 = vmatpush2.bf16.msra.mxu0 0
      %805 = vmatprep.mubr.bf16.mxu0 0
      %806 = vmatmul.mubr.bf16.gmra.mxu0 %v765
      %v807 = vpop.f32.mrf.mxu0
      %v808 = vadd.f32 0.0, %v807
      %v809 = vpop.f32.mrf.mxu0
      %v810 = vadd.f32 0.0, %v809
      %v811 = vpop.f32.mrf.mxu0
      %v812 = vpop.f32.mrf.mxu0
      %813 = vdwg.mxu0
      %v814 = vadd.f32 %v730, %v808
      %v815 = vadd.f32 %v732, %v810
      %v816 = vld [vmem:[%s4] sm:$0xf]
      %818 = vset.pattern.permute.xlu0 0
      %819 = vperm.xlu0 %818, %v816
      %v820 = vpop.permute.xlu0 %819
      %v822 = vadd.f32 %v814, %v820
      %v823 = vadd.f32 %v815, %v820
      %v824 = vsel %vm322, %v822, 0.0
      %v825 = vsel %vm322, %v823, 0.0
      %v826 = vadd.f32 %v824, %v825
      %827 = vadd.xlane.f32.xlu0 %v826
      %v828 = vpop.xlane.xlu0 %827
      %v829 = vmul.f32 %v828, %v547
      %v830 = vsub.f32 %v822, %v829
      %v831 = vsub.f32 %v823, %v829
      %v832 = vmul.f32 %v830, %v830
      %v833 = vmul.f32 %v831, %v831
      %v834 = vsel %vm322, %v832, 0.0
      %v835 = vsel %vm322, %v833, 0.0
      %v836 = vadd.f32 %v834, %v835
      %837 = vadd.xlane.f32.xlu0 %v836
      %v838 = vpop.xlane.xlu0 %837
      %v839 = vmul.f32 %v838, %v547
      %v840 = vadd.f32 %v839, 1e-05
      %v841 = vrsqrt.pop %v840
      %v842 = vmul.f32 %v830, %v841
      %v843 = vmul.f32 %v831, %v841
      %v846 = vcombine.low %v842, %v843
      %v848 = vadd.f32 %v261, %v846
      %849 = vst [vmem:[%s224] sm:$0xff] %v848
      %p850 = scmp.lt.s32.totalorder %s16, 1
      %s851 = scalar_select %p850, %s16, 1
      %s852 = smul.addr %s851, 2
      %s853 = smul.addr %s852, 4
      %s854 = scalar_lea.vmem %s5, %s853
      // Predicated region
      $region41: #{resnet_block.1} parent=39 // pred_check
        %p855 = pneg %p144
      $region42: #{resnet_block.1} parent=39 // pred_check_branch
        %857 = sbr.rel (%p855) target = $region44
      $region43: #{resnet_block.1} parent=39 // pred_region
        _
      $region44: #{resnet_block.1} parent=39 // pred_fallthru
        _
    $region40: #{resnet_block.1} parent=5 // pred_fallthru
      _
    %p858 = scmp.le.s32.totalorder 2, %s11
    // Predicated region
    $region45: #{resnet_block.1} parent=5 // pred_check
      %p859 = pneg %p858
    $region46: #{resnet_block.1} parent=5 // pred_check_branch
      %861 = sbr.rel (%p859) target = $region48
    $region47: #{resnet_block.1} parent=5 // pred_region
      %s862 = ssub.s32 %s11, 2
      // Predicated region
      $region49: #{resnet_block.1} parent=47 // pred_check
        %p863 = pneg %p150
      $region50: #{resnet_block.1} parent=47 // pred_check_branch
        %865 = sbr.rel (%p863) target = $region52
      $region51: #{resnet_block.1} parent=47 // pred_region
        %p866 = scmp.lt.s32.totalorder %s17, 1
        %s867 = scalar_select %p866, %s17, 1
        %s868 = smul.addr %s867, 2
        %s869 = smul.addr %s868, 4
        %s870 = scalar_lea.vmem %s5, %s869
      $region52: #{resnet_block.1} parent=47 // pred_fallthru
        _
    $region48: #{resnet_block.1} parent=5 // pred_fallthru
      _
  $region6: #{resnet_block.1} parent=0 // loop_footer
    %s15 = sadd.s32 1, %s11
  $region7: #{resnet_block.1} parent=0 // loop_footer_branch
    %10 = sbr.rel target = $region3
  $region8: #{resnet_block.1} parent=0 // loop_exit
    _

</llo_original>
